<compile_context>
chip_gen: v7x
topology: tpu7x:2x2x1
jax: 0.10.0
libtpu: 0.0.40
codegen_flags: <defaults>
</compile_context>

<pallas_src>
import jax
import jax.numpy as jnp
import numpy as np
from jax import lax
from jax.experimental import pallas as pl
from jax.experimental.pallas import tpu as pltpu

D = 3                      # spatial dimension (optical axis = x)
LANES = 128                # lane width
BLOCK_ROWS = 512           # default sublane rows per grid step (swept parameter)
MIN_BLOCK_ROWS = 32        # keeps int8 output blocks on their native sublane tile
VMEM_LIMIT_BYTES = 32 * 1024 * 1024


def _collision_kernel(scal_ref, p_ref, v_ref, tn_ref, valid_ref):
    # scal_ref (SMEM, scalar-prefetch) layout, f32[2*D*D + D + 2]:
    #   [0        : D*D      ]  A_inv (row major)   inverse linear part of surface tf
    #   [D*D      : 2*D*D    ]  sign(R) * A         direct linear part (normals only;
    #                                               sign(R) pre-folded so the 1/R
    #                                               scale can be dropped in-kernel)
    #   [2*D*D    : 2*D*D + D]  b                   translation part
    #   [-2], [-1]              R (radius of curvature), half-diameter
    off_ainv = 0
    off_a = D * D
    off_b = 2 * D * D
    Rc = scal_ref[off_b + D]
    half_diam = scal_ref[off_b + D + 1]

    # per-component loads; shift origin by -b once per component (hoisted)
    Psh = [p_ref[j] - scal_ref[off_b + j] for j in range(D)]   # (block_rows, LANES)
    Vg = [v_ref[j] for j in range(D)]

    # --- rays into the surface local frame: Pl = A_inv @ (P - b), Vl = A_inv @ V ---
    Pl, Vl = [], []
    for i in range(D):
        a0 = scal_ref[off_ainv + i * D]
        accp = a0 * Psh[0]
        accv = a0 * Vg[0]
        for j in range(1, D):
            aij = scal_ref[off_ainv + i * D + j]
            accp = accp + aij * Psh[j]
            accv = accv + aij * Vg[j]
        Pl.append(accp)
        Vl.append(accv)

    # --- sphere of radius R, center at (R, 0, 0), vertex at the local origin ---
    dvec = [Pl[0] - Rc] + [Pl[i] for i in range(1, D)]
    # half-b quadratic: aq t^2 + 2 hb t + cq = 0 (better conditioned, fewer VPU ops)
    aq = sum(Vl[i] * Vl[i] for i in range(D))
    hb = sum(Vl[i] * dvec[i] for i in range(D))
    cq = sum(dvec[i] * dvec[i] for i in range(D)) - Rc * Rc
    disc = hb * hb - aq * cq
    sq = jnp.sqrt(jnp.maximum(disc, 0.0))
    inv_a = pl.reciprocal(aq, approx=False)
    t1 = (-hb - sq) * inv_a
    t2 = (-hb + sq) * inv_a
    # pick the root whose hit point lies closer to the surface vertex (apex side)
    hx1 = Pl[0] + t1 * Vl[0]
    hx2 = Pl[0] + t2 * Vl[0]
    t = jnp.where(jnp.abs(hx1) <= jnp.abs(hx2), t1, t2)

    hit = [Pl[i] + t * Vl[i] for i in range(D)]
    rad2 = sum(hit[i] * hit[i] for i in range(1, D))
    valid = jnp.logical_and(disc >= 0.0, rad2 <= half_diam * half_diam)

    # --- un-normalized local normal (sphere center -> hit point) ---
    # 1/R scale dropped: magnitude absorbed by the final rsqrt, sign pre-folded
    # into the sign(R)*A block of the scalar table (correct for concave R < 0).
    nl = [hit[0] - Rc] + [hit[i] for i in range(1, D)]
    ng = []
    for i in range(D):
        acc = scal_ref[off_a + i * D] * nl[0]
        for j in range(1, D):
            acc = acc + scal_ref[off_a + i * D + j] * nl[j]
        ng.append(acc)
    inv_nrm = lax.rsqrt(sum(ng[i] * ng[i] for i in range(D)))

    # merged output: component 0 = t, components 1..D = global-frame unit normal
    tn_ref[0] = t
    for i in range(D):
        tn_ref[i + 1] = ng[i] * inv_nrm
    valid_ref[...] = valid.astype(jnp.int8)


def _compose_surface_transform(transforms, scale, dtype):
    """forward_kinematic(inputs.transforms + surface_transform) — Python glue."""
    S = scale * jnp.eye(D, dtype=dtype)
    S_inv = (1.0 / scale) * jnp.eye(D, dtype=dtype)
    chain = list(transforms) + [(S, jnp.zeros((D,), dtype=dtype), S_inv)]
    A = jnp.eye(D, dtype=dtype)
    b = jnp.zeros((D,), dtype=dtype)
    A_inv = jnp.eye(D, dtype=dtype)
    for (Ai, bi, Ai_inv) in chain:           # x_global = A x_local + b
        A, b, A_inv = A @ Ai, A @ bi + b, Ai_inv @ A_inv
    return A, b, A_inv


def _pick_block_rows(n_rays, requested):
    """Largest power-of-two block (<= requested) that still yields >= 2 grid steps
    when the ray count allows it, so the 'parallel' ray axis shards across both
    v7x TensorCores; never below MIN_BLOCK_ROWS sublane rows."""
    requested = int(requested)
    assert requested >= MIN_BLOCK_ROWS and (requested & (requested - 1)) == 0, \
        "block_rows must be a power of two >= MIN_BLOCK_ROWS"
    rows_needed = pl.cdiv(n_rays, LANES)
    br = requested
    while br > MIN_BLOCK_ROWS and pl.cdiv(rows_needed, br) < 2:
        br //= 2
    return max(br, MIN_BLOCK_ROWS)


def collision_surface_forward_planar(Pp, Vp, transforms, *, R, diameter, scale=1.0,
                                     anchors=("origin", "origin"),
                                     block_rows=BLOCK_ROWS):
    """Planar (transpose-free) entry point.

    Pp, Vp : (D, N) float32 global-frame ray origins / directions.
    Returns (t (N,), normals (D, N), valid bool (N,), new_chain).
    """
    d, N = Pp.shape
    assert d == D
    dtype = jnp.float32
    assert anchors == ("origin", "origin")   # TODO(synk): 'extent' anchors not modeled

    A, b, A_inv = _compose_surface_transform(transforms, scale, dtype)
    sgn_R = 1.0 if float(R) >= 0.0 else -1.0
    scalars = jnp.concatenate([
        A_inv.reshape(-1),
        (sgn_R * A).reshape(-1),          # sign(R) folded in for the normal push-back
        b.reshape(-1),
        jnp.array([R, diameter / 2.0], dtype=dtype),
    ]).astype(dtype)

    block_rows = _pick_block_rows(N, block_rows)
    tile = block_rows * LANES
    n_pad = pl.cdiv(N, tile) * tile
    pad = n_pad - N
    Pp = Pp.astype(dtype)
    Vp = Vp.astype(dtype)
    if pad:
        # padded directions are (1,1,1) so the quadratic stays non-degenerate;
        # padded lanes are sliced off below.
        Pp = jnp.concatenate([Pp, jnp.zeros((D, pad), dtype)], axis=1)
        Vp = jnp.concatenate([Vp, jnp.ones((D, pad), dtype)], axis=1)

    rows = n_pad // LANES
    P3 = Pp.reshape(D, rows, LANES)   # pure reshape: sublane+lane dense over rays
    V3 = Vp.reshape(D, rows, LANES)
    grid_steps = rows // block_rows

    grid_spec = pltpu.PrefetchScalarGridSpec(
        num_scalar_prefetch=1,                     # scalar table -> SMEM, once
        grid=(grid_steps,),
        in_specs=[
            pl.BlockSpec((D, block_rows, LANES), lambda i, scal: (0, i, 0)),      # P
            pl.BlockSpec((D, block_rows, LANES), lambda i, scal: (0, i, 0)),      # V
        ],
        out_specs=[
            pl.BlockSpec((D + 1, block_rows, LANES), lambda i, scal: (0, i, 0)),  # t+normals
            pl.BlockSpec((block_rows, LANES), lambda i, scal: (i, 0)),            # valid int8
        ],
    )

    cost = pl.CostEstimate(flops=110 * n_pad,
                           transcendentals=3 * n_pad,
                           bytes_accessed=41 * n_pad)

    tn3, valid3 = pl.pallas_call(
        _collision_kernel,
        grid_spec=grid_spec,
        out_shape=[
            jax.ShapeDtypeStruct((D + 1, rows, LANES), dtype),
            jax.ShapeDtypeStruct((rows, LANES), jnp.int8),
        ],
        compiler_params=pltpu.CompilerParams(
            dimension_semantics=("parallel",),
            vmem_limit_bytes=VMEM_LIMIT_BYTES),
        cost_estimate=cost,
    )(scalars, P3, V3)

    t = tn3[0].reshape(n_pad)[:N]
    normals = tn3[1:].reshape(D, n_pad)[:, :N]
    valid = valid3.reshape(n_pad)[:N].astype(bool)

    # kinematic_transform(): anchors == ('origin','origin') -> no extra transform
    new_chain = list(transforms)
    return t, normals, valid, new_chain


def collision_surface_forward(P, V, transforms, *, R, diameter, scale=1.0,
                              anchors=("origin", "origin"), block_rows=BLOCK_ROWS):
    """Pallas equivalent of CollisionSurface.forward with the torch (N, D) ray layout.

    NOTE: the (N, D) public layout costs one transpose each way; hot callers that
    keep rays planar should use `collision_surface_forward_planar` and skip them.
    """
    t, n_planar, valid, new_chain = collision_surface_forward_planar(
        P.T, V.T, transforms, R=R, diameter=diameter, scale=scale,
        anchors=anchors, block_rows=block_rows)
    return t, n_planar.T, valid, new_chain


def _reference(P, V, A, A_inv, b, R, diameter):
    """Pure-JAX reference for correctness checking (same half-b formulation)."""
    Pl = (P - b) @ A_inv.T
    Vl = V @ A_inv.T
    C = jnp.zeros((D,), P.dtype).at[0].set(R)
    dv = Pl - C
    aq = jnp.sum(Vl * Vl, -1)
    hb = jnp.sum(Vl * dv, -1)
    cq = jnp.sum(dv * dv, -1) - R * R
    disc = hb * hb - aq * cq
    sq = jnp.sqrt(jnp.maximum(disc, 0.0))
    t1 = (-hb - sq) / aq
    t2 = (-hb + sq) / aq
    hx1 = Pl[:, 0] + t1 * Vl[:, 0]
    hx2 = Pl[:, 0] + t2 * Vl[:, 0]
    t = jnp.where(jnp.abs(hx1) <= jnp.abs(hx2), t1, t2)
    hit = Pl + t[:, None] * Vl
    rad2 = jnp.sum(hit[:, 1:] ** 2, -1)
    valid = (disc >= 0.0) & (rad2 <= (diameter / 2.0) ** 2)
    nl = (hit - C) / R
    ng = nl @ A.T
    ng = ng / jnp.linalg.norm(ng, axis=-1, keepdims=True)
    return t, ng, valid, rad2, disc


if __name__ == "__main__":
    key = jax.random.PRNGKey(0)
    k1, k2 = jax.random.split(key, 2)

    # non-multiple of the ray tile -> exercises the padding / tail path, and the
    # padded grid has 2 parallel steps (shards across v7x's 2 TensorCores).
    N = 5000
    R = 5.0
    diameter = 4.0
    scale = 1.25

    # rays: start near x = -2, heading roughly +x
    trans = jax.random.uniform(k1, (N, 2), minval=-1.5, maxval=1.5)
    P = jnp.concatenate([jnp.full((N, 1), -2.0), trans], axis=1).astype(jnp.float32)
    dirs = jnp.concatenate(
        [jnp.ones((N, 1)), 0.1 * jax.random.normal(k2, (N, 2))], axis=1)
    V = (dirs / jnp.linalg.norm(dirs, axis=1, keepdims=True)).astype(jnp.float32)

    # incoming kinematic chain: one translation (element placed at x=3)
    T0 = (jnp.eye(D, dtype=jnp.float32),
          jnp.array([3.0, 0.1, -0.2], dtype=jnp.float32),
          jnp.eye(D, dtype=jnp.float32))
    transforms = [T0]

    t, normals, valid, new_chain = collision_surface_forward(
        P, V, transforms, R=R, diameter=diameter, scale=scale)
    jax.block_until_ready((t, normals, valid))

    # planar (transpose-free) entry point must agree
    t_p, n_p, v_p, _ = collision_surface_forward_planar(
        P.T, V.T, transforms, R=R, diameter=diameter, scale=scale)
    jax.block_until_ready((t_p, n_p, v_p))

    # correctness check against pure-JAX reference
    A = scale * jnp.eye(D, dtype=jnp.float32)
    A_inv = (1.0 / scale) * jnp.eye(D, dtype=jnp.float32)
    b = jnp.array([3.0, 0.1, -0.2], dtype=jnp.float32)
    t_ref, n_ref, v_ref, rad2_ref, disc_ref = _reference(P, V, A, A_inv, b, R, diameter)

    np.testing.assert_allclose(np.asarray(t), np.asarray(t_ref), rtol=1e-5, atol=1e-5)
    np.testing.assert_allclose(np.asarray(normals), np.asarray(n_ref), rtol=1e-5, atol=1e-5)
    # valid must match except exactly at the aperture boundary / tangency, where
    # f32 rounding differences can legitimately flip the comparison.
    mismatch = np.asarray(valid) != np.asarray(v_ref)
    near_edge = (np.abs(np.asarray(rad2_ref) - (diameter / 2.0) ** 2) < 1e-4) | \
                (np.abs(np.asarray(disc_ref)) < 1e-4)
    assert not np.any(mismatch & ~near_edge)

    np.testing.assert_allclose(np.asarray(t_p), np.asarray(t), rtol=0, atol=0)
    np.testing.assert_allclose(np.asarray(n_p.T), np.asarray(normals), rtol=0, atol=0)
    assert np.array_equal(np.asarray(v_p), np.asarray(valid))
    assert t.shape == (N,) and normals.shape == (N, D) and valid.shape == (N,)
    assert valid.dtype == jnp.bool_ and len(new_chain) == len(transforms)

    print("KERNEL_OK")
</pallas_src>

<mosaic_0001>
module attributes {stable_mosaic.version = 11 : i64} {
  func.func @_collision_kernel(%arg0: i32, %arg1: memref<23xf32, #tpu.memory_space<smem>>, %arg2: memref<3x32x128xf32, #tpu.memory_space<vmem>>, %arg3: memref<3x32x128xf32, #tpu.memory_space<vmem>>, %arg4: memref<4x32x128xf32, #tpu.memory_space<vmem>>, %arg5: memref<32x128xi8, #tpu.memory_space<vmem>>) attributes {dimension_semantics = [#tpu.dimension_semantics<parallel>], iteration_bounds = array<i64: 2>, scalar_prefetch = 1 : i64, scratch_operands = 0 : i64, tpu.core_type = #tpu.core_type<tc>, window_params = [{transform_indices = @transform_0, window_bounds = array<i64: 3, 32, 128>}, {transform_indices = @transform_1, window_bounds = array<i64: 3, 32, 128>}, {transform_indices = @transform_2, window_bounds = array<i64: 4, 32, 128>}, {transform_indices = @transform_3, window_bounds = array<i64: 32, 128>}]} {
    %c21 = arith.constant 21 : index
    %0 = memref.load %arg1[%c21] : memref<23xf32, #tpu.memory_space<smem>>
    %c22 = arith.constant 22 : index
    %1 = memref.load %arg1[%c22] : memref<23xf32, #tpu.memory_space<smem>>
    %c0 = arith.constant 0 : index
    %c0_0 = arith.constant 0 : index
    %c0_1 = arith.constant 0 : index
    %2 = vector.load %arg2[%c0, %c0_0, %c0_1] : memref<3x32x128xf32, #tpu.memory_space<vmem>>, vector<1x32x128xf32>
    %3 = vector.shape_cast %2 : vector<1x32x128xf32> to vector<32x128xf32>
    %c18 = arith.constant 18 : index
    %4 = memref.load %arg1[%c18] : memref<23xf32, #tpu.memory_space<smem>>
    %5 = vector.broadcast %4 : f32 to vector<32x128xf32>
    %6 = arith.subf %3, %5 : vector<32x128xf32>
    %c1 = arith.constant 1 : index
    %c0_2 = arith.constant 0 : index
    %c0_3 = arith.constant 0 : index
    %7 = vector.load %arg2[%c1, %c0_2, %c0_3] : memref<3x32x128xf32, #tpu.memory_space<vmem>>, vector<1x32x128xf32>
    %8 = vector.shape_cast %7 : vector<1x32x128xf32> to vector<32x128xf32>
    %c19 = arith.constant 19 : index
    %9 = memref.load %arg1[%c19] : memref<23xf32, #tpu.memory_space<smem>>
    %10 = vector.broadcast %9 : f32 to vector<32x128xf32>
    %11 = arith.subf %8, %10 : vector<32x128xf32>
    %c2 = arith.constant 2 : index
    %c0_4 = arith.constant 0 : index
    %c0_5 = arith.constant 0 : index
    %12 = vector.load %arg2[%c2, %c0_4, %c0_5] : memref<3x32x128xf32, #tpu.memory_space<vmem>>, vector<1x32x128xf32>
    %13 = vector.shape_cast %12 : vector<1x32x128xf32> to vector<32x128xf32>
    %c20 = arith.constant 20 : index
    %14 = memref.load %arg1[%c20] : memref<23xf32, #tpu.memory_space<smem>>
    %15 = vector.broadcast %14 : f32 to vector<32x128xf32>
    %16 = arith.subf %13, %15 : vector<32x128xf32>
    %c0_6 = arith.constant 0 : index
    %c0_7 = arith.constant 0 : index
    %c0_8 = arith.constant 0 : index
    %17 = vector.load %arg3[%c0_6, %c0_7, %c0_8] : memref<3x32x128xf32, #tpu.memory_space<vmem>>, vector<1x32x128xf32>
    %18 = vector.shape_cast %17 : vector<1x32x128xf32> to vector<32x128xf32>
    %c1_9 = arith.constant 1 : index
    %c0_10 = arith.constant 0 : index
    %c0_11 = arith.constant 0 : index
    %19 = vector.load %arg3[%c1_9, %c0_10, %c0_11] : memref<3x32x128xf32, #tpu.memory_space<vmem>>, vector<1x32x128xf32>
    %20 = vector.shape_cast %19 : vector<1x32x128xf32> to vector<32x128xf32>
    %c2_12 = arith.constant 2 : index
    %c0_13 = arith.constant 0 : index
    %c0_14 = arith.constant 0 : index
    %21 = vector.load %arg3[%c2_12, %c0_13, %c0_14] : memref<3x32x128xf32, #tpu.memory_space<vmem>>, vector<1x32x128xf32>
    %22 = vector.shape_cast %21 : vector<1x32x128xf32> to vector<32x128xf32>
    %c0_15 = arith.constant 0 : index
    %23 = memref.load %arg1[%c0_15] : memref<23xf32, #tpu.memory_space<smem>>
    %24 = vector.broadcast %23 : f32 to vector<32x128xf32>
    %25 = arith.mulf %24, %6 : vector<32x128xf32>
    %26 = vector.broadcast %23 : f32 to vector<32x128xf32>
    %27 = arith.mulf %26, %18 : vector<32x128xf32>
    %c1_16 = arith.constant 1 : index
    %28 = memref.load %arg1[%c1_16] : memref<23xf32, #tpu.memory_space<smem>>
    %29 = vector.broadcast %28 : f32 to vector<32x128xf32>
    %30 = arith.mulf %29, %11 : vector<32x128xf32>
    %31 = arith.addf %25, %30 : vector<32x128xf32>
    %32 = vector.broadcast %28 : f32 to vector<32x128xf32>
    %33 = arith.mulf %32, %20 : vector<32x128xf32>
    %34 = arith.addf %27, %33 : vector<32x128xf32>
    %c2_17 = arith.constant 2 : index
    %35 = memref.load %arg1[%c2_17] : memref<23xf32, #tpu.memory_space<smem>>
    %36 = vector.broadcast %35 : f32 to vector<32x128xf32>
    %37 = arith.mulf %36, %16 : vector<32x128xf32>
    %38 = arith.addf %31, %37 : vector<32x128xf32>
    %39 = vector.broadcast %35 : f32 to vector<32x128xf32>
    %40 = arith.mulf %39, %22 : vector<32x128xf32>
    %41 = arith.addf %34, %40 : vector<32x128xf32>
    %c3 = arith.constant 3 : index
    %42 = memref.load %arg1[%c3] : memref<23xf32, #tpu.memory_space<smem>>
    %43 = vector.broadcast %42 : f32 to vector<32x128xf32>
    %44 = arith.mulf %43, %6 : vector<32x128xf32>
    %45 = vector.broadcast %42 : f32 to vector<32x128xf32>
    %46 = arith.mulf %45, %18 : vector<32x128xf32>
    %c4 = arith.constant 4 : index
    %47 = memref.load %arg1[%c4] : memref<23xf32, #tpu.memory_space<smem>>
    %48 = vector.broadcast %47 : f32 to vector<32x128xf32>
    %49 = arith.mulf %48, %11 : vector<32x128xf32>
    %50 = arith.addf %44, %49 : vector<32x128xf32>
    %51 = vector.broadcast %47 : f32 to vector<32x128xf32>
    %52 = arith.mulf %51, %20 : vector<32x128xf32>
    %53 = arith.addf %46, %52 : vector<32x128xf32>
    %c5 = arith.constant 5 : index
    %54 = memref.load %arg1[%c5] : memref<23xf32, #tpu.memory_space<smem>>
    %55 = vector.broadcast %54 : f32 to vector<32x128xf32>
    %56 = arith.mulf %55, %16 : vector<32x128xf32>
    %57 = arith.addf %50, %56 : vector<32x128xf32>
    %58 = vector.broadcast %54 : f32 to vector<32x128xf32>
    %59 = arith.mulf %58, %22 : vector<32x128xf32>
    %60 = arith.addf %53, %59 : vector<32x128xf32>
    %c6 = arith.constant 6 : index
    %61 = memref.load %arg1[%c6] : memref<23xf32, #tpu.memory_space<smem>>
    %62 = vector.broadcast %61 : f32 to vector<32x128xf32>
    %63 = arith.mulf %62, %6 : vector<32x128xf32>
    %64 = vector.broadcast %61 : f32 to vector<32x128xf32>
    %65 = arith.mulf %64, %18 : vector<32x128xf32>
    %c7 = arith.constant 7 : index
    %66 = memref.load %arg1[%c7] : memref<23xf32, #tpu.memory_space<smem>>
    %67 = vector.broadcast %66 : f32 to vector<32x128xf32>
    %68 = arith.mulf %67, %11 : vector<32x128xf32>
    %69 = arith.addf %63, %68 : vector<32x128xf32>
    %70 = vector.broadcast %66 : f32 to vector<32x128xf32>
    %71 = arith.mulf %70, %20 : vector<32x128xf32>
    %72 = arith.addf %65, %71 : vector<32x128xf32>
    %c8 = arith.constant 8 : index
    %73 = memref.load %arg1[%c8] : memref<23xf32, #tpu.memory_space<smem>>
    %74 = vector.broadcast %73 : f32 to vector<32x128xf32>
    %75 = arith.mulf %74, %16 : vector<32x128xf32>
    %76 = arith.addf %69, %75 : vector<32x128xf32>
    %77 = vector.broadcast %73 : f32 to vector<32x128xf32>
    %78 = arith.mulf %77, %22 : vector<32x128xf32>
    %79 = arith.addf %72, %78 : vector<32x128xf32>
    %80 = vector.broadcast %0 : f32 to vector<32x128xf32>
    %81 = arith.subf %38, %80 : vector<32x128xf32>
    %82 = arith.mulf %41, %41 : vector<32x128xf32>
    %cst = arith.constant 0.000000e+00 : f32
    %83 = vector.broadcast %cst : f32 to vector<32x128xf32>
    %84 = arith.addf %83, %82 : vector<32x128xf32>
    %85 = arith.mulf %60, %60 : vector<32x128xf32>
    %86 = arith.addf %84, %85 : vector<32x128xf32>
    %87 = arith.mulf %79, %79 : vector<32x128xf32>
    %88 = arith.addf %86, %87 : vector<32x128xf32>
    %89 = arith.mulf %41, %81 : vector<32x128xf32>
    %cst_18 = arith.constant 0.000000e+00 : f32
    %90 = vector.broadcast %cst_18 : f32 to vector<32x128xf32>
    %91 = arith.addf %90, %89 : vector<32x128xf32>
    %92 = arith.mulf %60, %57 : vector<32x128xf32>
    %93 = arith.addf %91, %92 : vector<32x128xf32>
    %94 = arith.mulf %79, %76 : vector<32x128xf32>
    %95 = arith.addf %93, %94 : vector<32x128xf32>
    %96 = arith.mulf %81, %81 : vector<32x128xf32>
    %cst_19 = arith.constant 0.000000e+00 : f32
    %97 = vector.broadcast %cst_19 : f32 to vector<32x128xf32>
    %98 = arith.addf %97, %96 : vector<32x128xf32>
    %99 = arith.mulf %57, %57 : vector<32x128xf32>
    %100 = arith.addf %98, %99 : vector<32x128xf32>
    %101 = arith.mulf %76, %76 : vector<32x128xf32>
    %102 = arith.addf %100, %101 : vector<32x128xf32>
    %103 = arith.mulf %0, %0 : f32
    %104 = vector.broadcast %103 : f32 to vector<32x128xf32>
    %105 = arith.subf %102, %104 : vector<32x128xf32>
    %106 = arith.mulf %95, %95 : vector<32x128xf32>
    %107 = arith.mulf %88, %105 : vector<32x128xf32>
    %108 = arith.subf %106, %107 : vector<32x128xf32>
    %cst_20 = arith.constant 0.000000e+00 : f32
    %109 = vector.broadcast %cst_20 : f32 to vector<32x128xf32>
    %110 = arith.maximumf %108, %109 : vector<32x128xf32>
    %111 = math.sqrt %110 : vector<32x128xf32>
    %112 = tpu.reciprocal %88 : vector<32x128xf32> -> vector<32x128xf32>
    %cst_21 = arith.constant 0.000000e+00 : f32
    %113 = vector.broadcast %cst_21 : f32 to vector<32x128xf32>
    %114 = arith.subf %113, %95 : vector<32x128xf32>
    %115 = arith.subf %114, %111 : vector<32x128xf32>
    %116 = arith.mulf %115, %112 : vector<32x128xf32>
    %cst_22 = arith.constant 0.000000e+00 : f32
    %117 = vector.broadcast %cst_22 : f32 to vector<32x128xf32>
    %118 = arith.subf %117, %95 : vector<32x128xf32>
    %119 = arith.addf %118, %111 : vector<32x128xf32>
    %120 = arith.mulf %119, %112 : vector<32x128xf32>
    %121 = arith.mulf %116, %41 : vector<32x128xf32>
    %122 = arith.addf %38, %121 : vector<32x128xf32>
    %123 = arith.mulf %120, %41 : vector<32x128xf32>
    %124 = arith.addf %38, %123 : vector<32x128xf32>
    %125 = math.absf %122 : vector<32x128xf32>
    %126 = math.absf %124 : vector<32x128xf32>
    %127 = arith.cmpf ole, %125, %126 : vector<32x128xf32>
    %128 = arith.select %127, %116, %120 : vector<32x128xi1>, vector<32x128xf32>
    %129 = arith.mulf %128, %41 : vector<32x128xf32>
    %130 = arith.addf %38, %129 : vector<32x128xf32>
    %131 = arith.mulf %128, %60 : vector<32x128xf32>
    %132 = arith.addf %57, %131 : vector<32x128xf32>
    %133 = arith.mulf %128, %79 : vector<32x128xf32>
    %134 = arith.addf %76, %133 : vector<32x128xf32>
    %135 = arith.mulf %132, %132 : vector<32x128xf32>
    %cst_23 = arith.constant 0.000000e+00 : f32
    %136 = vector.broadcast %cst_23 : f32 to vector<32x128xf32>
    %137 = arith.addf %136, %135 : vector<32x128xf32>
    %138 = arith.mulf %134, %134 : vector<32x128xf32>
    %139 = arith.addf %137, %138 : vector<32x128xf32>
    %cst_24 = arith.constant 0.000000e+00 : f32
    %140 = vector.broadcast %cst_24 : f32 to vector<32x128xf32>
    %141 = arith.cmpf oge, %108, %140 : vector<32x128xf32>
    %142 = arith.mulf %1, %1 : f32
    %143 = vector.broadcast %142 : f32 to vector<32x128xf32>
    %144 = arith.cmpf ole, %139, %143 : vector<32x128xf32>
    %145 = arith.andi %141, %144 : vector<32x128xi1>
    %146 = vector.broadcast %0 : f32 to vector<32x128xf32>
    %147 = arith.subf %130, %146 : vector<32x128xf32>
    %c9 = arith.constant 9 : index
    %148 = memref.load %arg1[%c9] : memref<23xf32, #tpu.memory_space<smem>>
    %149 = vector.broadcast %148 : f32 to vector<32x128xf32>
    %150 = arith.mulf %149, %147 : vector<32x128xf32>
    %c10 = arith.constant 10 : index
    %151 = memref.load %arg1[%c10] : memref<23xf32, #tpu.memory_space<smem>>
    %152 = vector.broadcast %151 : f32 to vector<32x128xf32>
    %153 = arith.mulf %152, %132 : vector<32x128xf32>
    %154 = arith.addf %150, %153 : vector<32x128xf32>
    %c11 = arith.constant 11 : index
    %155 = memref.load %arg1[%c11] : memref<23xf32, #tpu.memory_space<smem>>
    %156 = vector.broadcast %155 : f32 to vector<32x128xf32>
    %157 = arith.mulf %156, %134 : vector<32x128xf32>
    %158 = arith.addf %154, %157 : vector<32x128xf32>
    %c12 = arith.constant 12 : index
    %159 = memref.load %arg1[%c12] : memref<23xf32, #tpu.memory_space<smem>>
    %160 = vector.broadcast %159 : f32 to vector<32x128xf32>
    %161 = arith.mulf %160, %147 : vector<32x128xf32>
    %c13 = arith.constant 13 : index
    %162 = memref.load %arg1[%c13] : memref<23xf32, #tpu.memory_space<smem>>
    %163 = vector.broadcast %162 : f32 to vector<32x128xf32>
    %164 = arith.mulf %163, %132 : vector<32x128xf32>
    %165 = arith.addf %161, %164 : vector<32x128xf32>
    %c14 = arith.constant 14 : index
    %166 = memref.load %arg1[%c14] : memref<23xf32, #tpu.memory_space<smem>>
    %167 = vector.broadcast %166 : f32 to vector<32x128xf32>
    %168 = arith.mulf %167, %134 : vector<32x128xf32>
    %169 = arith.addf %165, %168 : vector<32x128xf32>
    %c15 = arith.constant 15 : index
    %170 = memref.load %arg1[%c15] : memref<23xf32, #tpu.memory_space<smem>>
    %171 = vector.broadcast %170 : f32 to vector<32x128xf32>
    %172 = arith.mulf %171, %147 : vector<32x128xf32>
    %c16 = arith.constant 16 : index
    %173 = memref.load %arg1[%c16] : memref<23xf32, #tpu.memory_space<smem>>
    %174 = vector.broadcast %173 : f32 to vector<32x128xf32>
    %175 = arith.mulf %174, %132 : vector<32x128xf32>
    %176 = arith.addf %172, %175 : vector<32x128xf32>
    %c17 = arith.constant 17 : index
    %177 = memref.load %arg1[%c17] : memref<23xf32, #tpu.memory_space<smem>>
    %178 = vector.broadcast %177 : f32 to vector<32x128xf32>
    %179 = arith.mulf %178, %134 : vector<32x128xf32>
    %180 = arith.addf %176, %179 : vector<32x128xf32>
    %181 = arith.mulf %158, %158 : vector<32x128xf32>
    %cst_25 = arith.constant 0.000000e+00 : f32
    %182 = vector.broadcast %cst_25 : f32 to vector<32x128xf32>
    %183 = arith.addf %182, %181 : vector<32x128xf32>
    %184 = arith.mulf %169, %169 : vector<32x128xf32>
    %185 = arith.addf %183, %184 : vector<32x128xf32>
    %186 = arith.mulf %180, %180 : vector<32x128xf32>
    %187 = arith.addf %185, %186 : vector<32x128xf32>
    %188 = math.rsqrt %187 : vector<32x128xf32>
    %c0_26 = arith.constant 0 : index
    %c0_27 = arith.constant 0 : index
    %c0_28 = arith.constant 0 : index
    %189 = vector.load %arg4[%c0_26, %c0_27, %c0_28] : memref<4x32x128xf32, #tpu.memory_space<vmem>>, vector<1x32x128xf32>
    %190 = vector.shape_cast %189 : vector<1x32x128xf32> to vector<32x128xf32>
    %191 = vector.shape_cast %128 : vector<32x128xf32> to vector<1x32x128xf32>
    tpu.vector_store %arg4[%c0_26, %c0_27, %c0_28], %191 {strides = array<i32>} : memref<4x32x128xf32, #tpu.memory_space<vmem>>, vector<1x32x128xf32>,
    %192 = arith.mulf %158, %188 : vector<32x128xf32>
    %c1_29 = arith.constant 1 : index
    %c0_30 = arith.constant 0 : index
    %c0_31 = arith.constant 0 : index
    %193 = vector.load %arg4[%c1_29, %c0_30, %c0_31] : memref<4x32x128xf32, #tpu.memory_space<vmem>>, vector<1x32x128xf32>
    %194 = vector.shape_cast %193 : vector<1x32x128xf32> to vector<32x128xf32>
    %195 = vector.shape_cast %192 : vector<32x128xf32> to vector<1x32x128xf32>
    tpu.vector_store %arg4[%c1_29, %c0_30, %c0_31], %195 {strides = array<i32>} : memref<4x32x128xf32, #tpu.memory_space<vmem>>, vector<1x32x128xf32>,
    %196 = arith.mulf %169, %188 : vector<32x128xf32>
    %c2_32 = arith.constant 2 : index
    %c0_33 = arith.constant 0 : index
    %c0_34 = arith.constant 0 : index
    %197 = vector.load %arg4[%c2_32, %c0_33, %c0_34] : memref<4x32x128xf32, #tpu.memory_space<vmem>>, vector<1x32x128xf32>
    %198 = vector.shape_cast %197 : vector<1x32x128xf32> to vector<32x128xf32>
    %199 = vector.shape_cast %196 : vector<32x128xf32> to vector<1x32x128xf32>
    tpu.vector_store %arg4[%c2_32, %c0_33, %c0_34], %199 {strides = array<i32>} : memref<4x32x128xf32, #tpu.memory_space<vmem>>, vector<1x32x128xf32>,
    %200 = arith.mulf %180, %188 : vector<32x128xf32>
    %c3_35 = arith.constant 3 : index
    %c0_36 = arith.constant 0 : index
    %c0_37 = arith.constant 0 : index
    %201 = vector.load %arg4[%c3_35, %c0_36, %c0_37] : memref<4x32x128xf32, #tpu.memory_space<vmem>>, vector<1x32x128xf32>
    %202 = vector.shape_cast %201 : vector<1x32x128xf32> to vector<32x128xf32>
    %203 = vector.shape_cast %200 : vector<32x128xf32> to vector<1x32x128xf32>
    tpu.vector_store %arg4[%c3_35, %c0_36, %c0_37], %203 {strides = array<i32>} : memref<4x32x128xf32, #tpu.memory_space<vmem>>, vector<1x32x128xf32>,
    %204 = arith.extui %145 : vector<32x128xi1> to vector<32x128xi8>
    %c0_38 = arith.constant 0 : index
    %c0_39 = arith.constant 0 : index
    %205 = vector.load %arg5[%c0_38, %c0_39] : memref<32x128xi8, #tpu.memory_space<vmem>>, vector<32x128xi8>
    tpu.vector_store %arg5[%c0_38, %c0_39], %204 {strides = array<i32>} : memref<32x128xi8, #tpu.memory_space<vmem>>, vector<32x128xi8>,
    return
  }
  func.func @transform_0(%arg0: i32, %arg1: memref<23xf32, #tpu.memory_space<smem>>) -> (i32, i32, i32) {
    %c0_i32 = arith.constant 0 : i32
    %c0_i32_0 = arith.constant 0 : i32
    %c0_i32_1 = arith.constant 0 : i32
    return %c0_i32, %arg0, %c0_i32_0 : i32, i32, i32
  }
  func.func @transform_1(%arg0: i32, %arg1: memref<23xf32, #tpu.memory_space<smem>>) -> (i32, i32, i32) {
    %c0_i32 = arith.constant 0 : i32
    %c0_i32_0 = arith.constant 0 : i32
    %c0_i32_1 = arith.constant 0 : i32
    return %c0_i32, %arg0, %c0_i32_0 : i32, i32, i32
  }
  func.func @transform_2(%arg0: i32, %arg1: memref<23xf32, #tpu.memory_space<smem>>) -> (i32, i32, i32) {
    %c0_i32 = arith.constant 0 : i32
    %c0_i32_0 = arith.constant 0 : i32
    %c0_i32_1 = arith.constant 0 : i32
    return %c0_i32, %arg0, %c0_i32_0 : i32, i32, i32
  }
  func.func @transform_3(%arg0: i32, %arg1: memref<23xf32, #tpu.memory_space<smem>>) -> (i32, i32) {
    %c0_i32 = arith.constant 0 : i32
    %c0_i32_0 = arith.constant 0 : i32
    return %arg0, %c0_i32 : i32, i32
  }
}

</mosaic_0001>

<llo_original>
// kernel: tpu_custom_call.1
$region0: #{tpu_custom_call.1}
  #allocation0 [shape = 'u32[]', space=smem, size = 0x4, offset = 0x4, fixed_abs, tag = 'smem constant byte address 0x4 - core index']
  #allocation1 [shape = 'u32[144,128]{1,0:T(1,128)}', space=vmem, size = 0x12000, scoped, tag = 'internal scratch']
  #allocation2 [shape = 's32[1]{0}', space=sflag, size = 0x4, scoped, tag = 'scoped memory for tpu_custom_call.1']
  #allocation3 [shape = 'u8[512]{0}', space=smem, size = 0x200, scoped, tag = 'prefetched SMEM operand 0']
  #allocation12 [shape = 's32[]', space=sflag, size = 0x4, offset = 0, fixed_abs, tag = 'sflag constant byte address 0x0 - dummy sync flag']
  #allocation14 [shape = 's32[]', space=sflag, size = 0x4, offset = 0, fixed_abs, tag = 'sflag constant byte address 0x0 - dummy sync flag']
  #allocation16 [shape = 's32[]', space=sflag, size = 0x4, offset = 0, fixed_abs, tag = 'sflag constant byte address 0x0 - dummy sync flag']
  %s0 = inlined_call_operand.hbm [shape: f32[23], index: 0, kind: input, shape index: {}]
  %s1 = inlined_call_operand.hbm [shape: f32[3,64,128], index: 1, kind: input, shape index: {}]
  %s2 = inlined_call_operand.hbm [shape: f32[3,64,128], index: 2, kind: input, shape index: {}]
  %s3 = inlined_call_operand.hbm [shape: f32[4,64,128], index: 3, kind: output, shape index: {0}]
  %s4 = inlined_call_operand.hbm [shape: s8[64,128], index: 4, kind: output, shape index: {1}]
  %5 = xla_tuple %s3, %s4
  %s6 = sld [smem:[#allocation0]]
  $region57: #{tpu_custom_call.1} parent=0
    _
  %s8 = ssub.s32 1, %s6
  %s9 = scalar_select 0, %s8, %s6
  %11 = dma.hbm_to_smem %s0, 16, [#allocation3], [#allocation2]
  %12 = dma.done [#allocation2], 16
  %13 = sfence
  $region1: #{tpu_custom_call.1} parent=0
    #allocation4 [shape = 'u8[98304]{0}', space=vmem, size = 0x18000, scoped, tag = 'input window, operand 1']
    #allocation5 [shape = 's32[2]{0}', space=sflag, size = 0x8, scoped, tag = 'scoped memory for tpu_custom_call.1']
    #allocation6 [shape = 's32[2]{0}', space=sflag, size = 0x8, scoped, tag = 'scoped memory for tpu_custom_call.1']
    #allocation7 [shape = 'u8[98304]{0}', space=vmem, size = 0x18000, scoped, tag = 'input window, operand 2']
    #allocation8 [shape = 's32[2]{0}', space=sflag, size = 0x8, scoped, tag = 'scoped memory for tpu_custom_call.1']
    #allocation9 [shape = 'u8[131072]{0}', space=vmem, size = 0x20000, scoped, tag = 'output window, operand 0']
    #allocation10 [shape = 'u8[8192]{0}', space=vmem, size = 0x2000, scoped, tag = 'output window, operand 1']
    #allocation11 [shape = 's32[2]{0}', space=sflag, size = 0x8, scoped, tag = 'scoped memory for tpu_custom_call.1']
    %14 = vsyncpa [#allocation5], 0
    %s15 = scalar_lea.sflag [#allocation5], 1
    %16 = vsyncpa %s15, 0
    %17 = vsyncpa [#allocation8], 0
    %s18 = scalar_lea.sflag [#allocation8], 1
    %19 = vsyncpa %s18, 0
    %20 = vsyncpa [#allocation6], 0
    %s21 = scalar_lea.sflag [#allocation6], 1
    %22 = vsyncpa %s21, 0
    %23 = vsyncpa [#allocation11], 0
    %s24 = scalar_lea.sflag [#allocation11], 1
    %25 = vsyncpa %s24, 0
    loop: start=0, step=1, limit=4
    $region2: #{tpu_custom_call.1} parent=1 // loop_pre_header
      _
    $region3: #{tpu_custom_call.1} parent=1 // loop_header
      %s27 = sphi 0, %s31
      %p28 = scmp.ge.s32.totalorder %s27, 4
      %s37 = sphi 0, %s39
      %s40 = sphi 0, %s37
      %s41 = sphi 0, %s40
      %s57 = sphi 0, %s41
      %s63 = sphi 0, %s65
      %s66 = sphi 0, %s63
      %s67 = sphi 0, %s66
      %s83 = sphi 0, %s67
      %s89 = sphi 0, %s91
      %s92 = sphi 0, %s89
      %s93 = sphi 0, %s92
      %s109 = sphi 0, %s93
      %s115 = sphi 0, %s117
      %s118 = sphi 0, %s115
      %s119 = sphi 0, %s118
      %s135 = sphi 0, %s119
    $region4: #{tpu_custom_call.1} parent=1 // loop_header_branch
      %30 = sbr.rel (%p28) target = $region8
    $region5: #{tpu_custom_call.1} parent=1 // loop_body
      %s32 = ssub.s32 %s27, 1
      %s33 = ssub.s32 %s27, 2
      %s34 = sadd.s32 %s27, 1
      %s35 = ssub.s32 %s27, %s34
      %p36 = scmp.eq.s32.totalorder %s35, 0
      %s38 = sadd.s32 %s37, 1
      %s39 = scalar_select %p36, %s37, %s38
      %p42 = pneg %p36
      %p43 = scmp.eq.s32.totalorder %s27, 1
      %p44 = por %p42, %p43
      %p45 = scmp.ne.s32.totalorder %s37, %s40
      %p46 = scmp.eq.s32.totalorder %s27, 0
      %p47 = por %p45, %p46
      %p48 = scmp.ne.s32.totalorder %s37, %s40
      %p49 = scmp.eq.s32.totalorder %s32, 1
      %p50 = por %p48, %p49
      %p51 = scmp.ne.s32.totalorder %s40, %s41
      %p52 = scmp.eq.s32.totalorder %s32, 0
      %p53 = por %p51, %p52
      %p54 = scmp.ne.s32.totalorder %s40, %s41
      %p55 = scmp.eq.s32.totalorder %s33, 1
      %p56 = por %p54, %p55
      %p58 = scmp.ne.s32.totalorder %s41, %s57
      %p59 = scmp.eq.s32.totalorder %s33, 0
      %p60 = por %p58, %p59
      %s61 = ssub.s32 %s27, %s34
      %p62 = scmp.eq.s32.totalorder %s61, 0
      %s64 = sadd.s32 %s63, 1
      %s65 = scalar_select %p62, %s63, %s64
      %p68 = pneg %p62
      %p69 = scmp.eq.s32.totalorder %s27, 1
      %p70 = por %p68, %p69
      %p71 = scmp.ne.s32.totalorder %s63, %s66
      %p72 = scmp.eq.s32.totalorder %s27, 0
      %p73 = por %p71, %p72
      %p74 = scmp.ne.s32.totalorder %s63, %s66
      %p75 = scmp.eq.s32.totalorder %s32, 1
      %p76 = por %p74, %p75
      %p77 = scmp.ne.s32.totalorder %s66, %s67
      %p78 = scmp.eq.s32.totalorder %s32, 0
      %p79 = por %p77, %p78
      %p80 = scmp.ne.s32.totalorder %s66, %s67
      %p81 = scmp.eq.s32.totalorder %s33, 1
      %p82 = por %p80, %p81
      %p84 = scmp.ne.s32.totalorder %s67, %s83
      %p85 = scmp.eq.s32.totalorder %s33, 0
      %p86 = por %p84, %p85
      %s87 = ssub.s32 %s27, %s34
      %p88 = scmp.eq.s32.totalorder %s87, 0
      %s90 = sadd.s32 %s89, 1
      %s91 = scalar_select %p88, %s89, %s90
      %p94 = pneg %p88
      %p95 = scmp.eq.s32.totalorder %s27, 1
      %p96 = por %p94, %p95
      %p97 = scmp.ne.s32.totalorder %s89, %s92
      %p98 = scmp.eq.s32.totalorder %s27, 0
      %p99 = por %p97, %p98
      %p100 = scmp.ne.s32.totalorder %s89, %s92
      %p101 = scmp.eq.s32.totalorder %s32, 1
      %p102 = por %p100, %p101
      %p103 = scmp.ne.s32.totalorder %s92, %s93
      %p104 = scmp.eq.s32.totalorder %s32, 0
      %p105 = por %p103, %p104
      %p106 = scmp.ne.s32.totalorder %s92, %s93
      %p107 = scmp.eq.s32.totalorder %s33, 1
      %p108 = por %p106, %p107
      %p110 = scmp.ne.s32.totalorder %s93, %s109
      %p111 = scmp.eq.s32.totalorder %s33, 0
      %p112 = por %p110, %p111
      %s113 = ssub.s32 %s27, %s34
      %p114 = scmp.eq.s32.totalorder %s113, 0
      %s116 = sadd.s32 %s115, 1
      %s117 = scalar_select %p114, %s115, %s116
      %p120 = pneg %p114
      %p121 = scmp.eq.s32.totalorder %s27, 1
      %p122 = por %p120, %p121
      %p123 = scmp.ne.s32.totalorder %s115, %s118
      %p124 = scmp.eq.s32.totalorder %s27, 0
      %p125 = por %p123, %p124
      %p126 = scmp.ne.s32.totalorder %s115, %s118
      %p127 = scmp.eq.s32.totalorder %s32, 1
      %p128 = por %p126, %p127
      %p129 = scmp.ne.s32.totalorder %s118, %s119
      %p130 = scmp.eq.s32.totalorder %s32, 0
      %p131 = por %p129, %p130
      %p132 = scmp.ne.s32.totalorder %s118, %s119
      %p133 = scmp.eq.s32.totalorder %s33, 1
      %p134 = por %p132, %p133
      %p136 = scmp.ne.s32.totalorder %s119, %s135
      %p137 = scmp.eq.s32.totalorder %s33, 0
      %p138 = por %p136, %p137
      %p139 = scmp.le.s32.totalorder 1, %s27
      %p140 = scmp.lt.s32.totalorder %s27, 3
      %p141 = pnand %p139, %p140
      %p142 = pneg %p141
      // Predicated region
      $region9: #{tpu_custom_call.1} parent=5 // pred_check
        _
      $region10: #{tpu_custom_call.1} parent=5 // pred_check_branch
        %144 = sbr.rel (%p141) target = $region12
      $region11: #{tpu_custom_call.1} parent=5 // pred_region
        %s145 = ssub.s32 %s27, 1
      $region12: #{tpu_custom_call.1} parent=5 // pred_fallthru
        _
      %p146 = scmp.lt.s32.totalorder %s27, 2
      // Predicated region
      $region13: #{tpu_custom_call.1} parent=5 // pred_check
        %p147 = pneg %p146
      $region14: #{tpu_custom_call.1} parent=5 // pred_check_branch
        %149 = sbr.rel (%p147) target = $region16
      $region15: #{tpu_custom_call.1} parent=5 // pred_region
        // Predicated region
        $region17: #{tpu_custom_call.1} parent=15 // pred_check
          %p150 = pneg %p47
        $region18: #{tpu_custom_call.1} parent=15 // pred_check_branch
          %152 = sbr.rel (%p150) target = $region20
        $region19: #{tpu_custom_call.1} parent=15 // pred_region
          #allocation13 [shape = 'u32[6]{0}', space=smem, size = 0x18, scoped, tag = 'DMA stride descriptor']
          %s153 = sand.u32 %s37, 1
          %s154 = scalar_lea.sflag [#allocation5], %s153
          %s155 = sand.u32 %s37, 1
          %s156 = smul.addr %s155, 96
          %s157 = scalar_lea.vmem [#allocation4], %s156
          %s158 = smul.u32 4, %s27
          %s160 = ssub.s32 1536, 1536
          %161 = vsyncadd %s154, %s160
          %s162 = smul.addr %s158, 128
          %s163 = scalar_lea.hbm %s1, %s162
          %s165 = sshll.u32 1, 14
          %s166 = sxor.u32 4294967295, %s165
          %s168 = sld [smem:[#allocation0]]
          %s169 = sadd.s32 2, %s168
          %s171 = sshll.u32 7, 26
          %s172 = sxor.u32 4294967295, %s171
          %s173 = sand.u32 0, %s172
          %s174 = sshll.u32 %s169, 26
          %s175 = sor.u32 %s173, %s174
          %s176 = sshll.u32 %s157, 4
          %s177 = int_to_ptr.vmem [resolvable:$true] %s176
          %183 = sst [smem:[#allocation13]] 1024
          %s184 = scalar_lea.smem [#allocation13], 1
          %185 = sst [smem:[%s184]] 512
          %s186 = scalar_lea.smem [#allocation13], 2
          %187 = sst [smem:[%s186]] 4
          %s188 = scalar_lea.smem [#allocation13], 3
          %189 = sst [smem:[%s188]] 128
          %s190 = scalar_lea.smem [#allocation13], 4
          %191 = sst [smem:[%s190]] 128
          %s192 = scalar_lea.smem [#allocation13], 5
          %193 = sst [smem:[%s192]] 8
          %195 = dma.general %s163, 1536, %s177, %s154, [#allocation12], [#allocation13], %s175, 0
        $region20: #{tpu_custom_call.1} parent=15 // pred_fallthru
          _
        // Predicated region
        $region21: #{tpu_custom_call.1} parent=15 // pred_check
          %p196 = pneg %p73
        $region22: #{tpu_custom_call.1} parent=15 // pred_check_branch
          %198 = sbr.rel (%p196) target = $region24
        $region23: #{tpu_custom_call.1} parent=15 // pred_region
          #allocation15 [shape = 'u32[6]{0}', space=smem, size = 0x18, scoped, tag = 'DMA stride descriptor']
          %s199 = sand.u32 %s63, 1
          %s200 = scalar_lea.sflag [#allocation8], %s199
          %s201 = sand.u32 %s63, 1
          %s202 = smul.addr %s201, 96
          %s203 = scalar_lea.vmem [#allocation7], %s202
          %s204 = smul.u32 4, %s27
          %s206 = ssub.s32 1536, 1536
          %207 = vsyncadd %s200, %s206
          %s208 = smul.addr %s204, 128
          %s209 = scalar_lea.hbm %s2, %s208
          %s211 = sshll.u32 1, 14
          %s212 = sxor.u32 4294967295, %s211
          %s214 = sld [smem:[#allocation0]]
          %s215 = sadd.s32 2, %s214
          %s217 = sshll.u32 7, 26
          %s218 = sxor.u32 4294967295, %s217
          %s219 = sand.u32 0, %s218
          %s220 = sshll.u32 %s215, 26
          %s221 = sor.u32 %s219, %s220
          %s222 = sshll.u32 %s203, 4
          %s223 = int_to_ptr.vmem [resolvable:$true] %s222
          %229 = sst [smem:[#allocation15]] 1024
          %s230 = scalar_lea.smem [#allocation15], 1
          %231 = sst [smem:[%s230]] 512
          %s232 = scalar_lea.smem [#allocation15], 2
          %233 = sst [smem:[%s232]] 4
          %s234 = scalar_lea.smem [#allocation15], 3
          %235 = sst [smem:[%s234]] 128
          %s236 = scalar_lea.smem [#allocation15], 4
          %237 = sst [smem:[%s236]] 128
          %s238 = scalar_lea.smem [#allocation15], 5
          %239 = sst [smem:[%s238]] 8
          %241 = dma.general %s209, 1536, %s223, %s200, [#allocation14], [#allocation15], %s221, 0
        $region24: #{tpu_custom_call.1} parent=15 // pred_fallthru
          _
      $region16: #{tpu_custom_call.1} parent=5 // pred_fallthru
        _
      %p242 = scmp.le.s32.totalorder 1, %s27
      %p243 = scmp.lt.s32.totalorder %s27, 3
      %p244 = pnand %p242, %p243
      %p245 = pneg %p244
      // Predicated region
      $region25: #{tpu_custom_call.1} parent=5 // pred_check
        _
      $region26: #{tpu_custom_call.1} parent=5 // pred_check_branch
        %247 = sbr.rel (%p244) target = $region28
      $region27: #{tpu_custom_call.1} parent=5 // pred_region
        %s248 = ssub.s32 %s27, 1
        %s249 = sand.u32 %s40, 1
        %s250 = scalar_lea.sflag [#allocation5], %s249
        %s251 = sand.u32 %s40, 1
        %s252 = smul.addr %s251, 96
        %s253 = scalar_lea.vmem [#allocation4], %s252
        // Predicated region
        $region29: #{tpu_custom_call.1} parent=27 // pred_check
          %p254 = pneg %p53
        $region30: #{tpu_custom_call.1} parent=27 // pred_check_branch
          %256 = sbr.rel (%p254) target = $region32
        $region31: #{tpu_custom_call.1} parent=27 // pred_region
          %257 = dma.done %s250, 1536
        $region32: #{tpu_custom_call.1} parent=27 // pred_fallthru
          _
        %s258 = sand.u32 %s66, 1
        %s259 = scalar_lea.sflag [#allocation8], %s258
        %s260 = sand.u32 %s66, 1
        %s261 = smul.addr %s260, 96
        %s262 = scalar_lea.vmem [#allocation7], %s261
        // Predicated region
        $region33: #{tpu_custom_call.1} parent=27 // pred_check
          %p263 = pneg %p79
        $region34: #{tpu_custom_call.1} parent=27 // pred_check_branch
          %265 = sbr.rel (%p263) target = $region36
        $region35: #{tpu_custom_call.1} parent=27 // pred_region
          %266 = dma.done %s259, 1536
        $region36: #{tpu_custom_call.1} parent=27 // pred_fallthru
          _
        %s267 = sand.u32 %s40, 1
        %s268 = scalar_lea.sflag [#allocation5], %s267
        %s269 = sand.u32 %s40, 1
        %s270 = smul.addr %s269, 96
        %s271 = scalar_lea.vmem [#allocation4], %s270
        %p272 = pneg %p53
        %p273 = pneg %p50
        %s274 = sand.u32 %s66, 1
        %s275 = scalar_lea.sflag [#allocation8], %s274
        %s276 = sand.u32 %s66, 1
        %s277 = smul.addr %s276, 96
        %s278 = scalar_lea.vmem [#allocation7], %s277
        %p279 = pneg %p79
        %p280 = pneg %p76
        %p281 = pneg %p105
        %p282 = pneg %p102
        %s283 = sand.u32 %s92, 1
        %s284 = scalar_lea.sflag [#allocation6], %s283
        %s285 = sand.u32 %s92, 1
        %s286 = smul.addr %s285, 128
        %s287 = scalar_lea.vmem [#allocation9], %s286
        %p288 = pneg %p131
        %p289 = pneg %p128
        %s290 = sand.u32 %s118, 1
        %s291 = scalar_lea.sflag [#allocation11], %s290
        %s292 = sand.u32 %s118, 1
        %s293 = smul.addr %s292, 8
        %s294 = scalar_lea.vmem [#allocation10], %s293
        %s295 = smul.u32 4, %s32
        %s296 = smul.u32 4, %s32
        %s297 = smul.u32 4, %s32
        %s300 = sld [smem:[#allocation3 + $0x15]]
        %s301 = sld [smem:[#allocation3 + $0x16]]
        %v302 = vld [vmem:[%s253] sm:$0xff]
        %v303 = vld [vmem:[%s253 + $0x8] sm:$0xff]
        %v304 = vld [vmem:[%s253 + $0x10] sm:$0xff]
        %v305 = vld [vmem:[%s253 + $0x18] sm:$0xff]
        %s306 = sld [smem:[#allocation3 + $0x12]]
        %v307 = vstv %s306
        %v308 = vsub.f32 %v302, %v307
        %v309 = vsub.f32 %v303, %v307
        %v310 = vsub.f32 %v304, %v307
        %v311 = vsub.f32 %v305, %v307
        %s312 = scalar_lea.vmem %s253, 32 [#allocation4]
        %v313 = vld [vmem:[%s312] sm:$0xff]
        %v314 = vld [vmem:[%s312 + $0x8] sm:$0xff]
        %v315 = vld [vmem:[%s312 + $0x10] sm:$0xff]
        %v316 = vld [vmem:[%s312 + $0x18] sm:$0xff]
        %s317 = sld [smem:[#allocation3 + $0x13]]
        %v318 = vstv %s317
        %v319 = vsub.f32 %v313, %v318
        %v320 = vsub.f32 %v314, %v318
        %v321 = vsub.f32 %v315, %v318
        %v322 = vsub.f32 %v316, %v318
        %s323 = scalar_lea.vmem %s253, 64 [#allocation4]
        %v324 = vld [vmem:[%s323] sm:$0xff]
        %v325 = vld [vmem:[%s323 + $0x8] sm:$0xff]
        %v326 = vld [vmem:[%s323 + $0x10] sm:$0xff]
        %v327 = vld [vmem:[%s323 + $0x18] sm:$0xff]
        %s328 = sld [smem:[#allocation3 + $0x14]]
        %v329 = vstv %s328
        %v330 = vsub.f32 %v324, %v329
        %v331 = vsub.f32 %v325, %v329
        %v332 = vsub.f32 %v326, %v329
        %v333 = vsub.f32 %v327, %v329
        %v334 = vld [vmem:[%s262] sm:$0xff]
        %v335 = vld [vmem:[%s262 + $0x8] sm:$0xff]
        %v336 = vld [vmem:[%s262 + $0x10] sm:$0xff]
        %v337 = vld [vmem:[%s262 + $0x18] sm:$0xff]
        %s338 = scalar_lea.vmem %s262, 32 [#allocation7]
        %v339 = vld [vmem:[%s338] sm:$0xff]
        %v340 = vld [vmem:[%s338 + $0x8] sm:$0xff]
        %v341 = vld [vmem:[%s338 + $0x10] sm:$0xff]
        %v342 = vld [vmem:[%s338 + $0x18] sm:$0xff]
        %s343 = scalar_lea.vmem %s262, 64 [#allocation7]
        %v344 = vld [vmem:[%s343] sm:$0xff]
        %v345 = vld [vmem:[%s343 + $0x8] sm:$0xff]
        %v346 = vld [vmem:[%s343 + $0x10] sm:$0xff]
        %v347 = vld [vmem:[%s343 + $0x18] sm:$0xff]
        %s348 = sld [smem:[#allocation3]]
        %v349 = vstv %s348
        %v350 = vmul.f32 %v349, %v308
        %v351 = vmul.f32 %v349, %v309
        %v352 = vmul.f32 %v349, %v310
        %v353 = vmul.f32 %v349, %v311
        %v354 = vmul.f32 %v349, %v334
        %v355 = vmul.f32 %v349, %v335
        %v356 = vmul.f32 %v349, %v336
        %v357 = vmul.f32 %v349, %v337
        %s358 = sld [smem:[#allocation3 + $0x1]]
        %v359 = vstv %s358
        %v360 = vmul.f32 %v359, %v319
        %v361 = vmul.f32 %v359, %v320
        %v362 = vmul.f32 %v359, %v321
        %v363 = vmul.f32 %v359, %v322
        %v364 = vadd.f32 %v350, %v360
        %v365 = vadd.f32 %v351, %v361
        %v366 = vadd.f32 %v352, %v362
        %v367 = vadd.f32 %v353, %v363
        %v368 = vmul.f32 %v359, %v339
        %v369 = vmul.f32 %v359, %v340
        %v370 = vmul.f32 %v359, %v341
        %v371 = vmul.f32 %v359, %v342
        %v372 = vadd.f32 %v354, %v368
        %v373 = vadd.f32 %v355, %v369
        %v374 = vadd.f32 %v356, %v370
        %v375 = vadd.f32 %v357, %v371
        %s376 = sld [smem:[#allocation3 + $0x2]]
        %v377 = vstv %s376
        %v378 = vmul.f32 %v377, %v330
        %v379 = vmul.f32 %v377, %v331
        %v380 = vmul.f32 %v377, %v332
        %v381 = vmul.f32 %v377, %v333
        %v382 = vadd.f32 %v364, %v378
        %v383 = vadd.f32 %v365, %v379
        %v384 = vadd.f32 %v366, %v380
        %v385 = vadd.f32 %v367, %v381
        %v386 = vmul.f32 %v377, %v344
        %v387 = vmul.f32 %v377, %v345
        %v388 = vmul.f32 %v377, %v346
        %v389 = vmul.f32 %v377, %v347
        %v390 = vadd.f32 %v372, %v386
        %v391 = vadd.f32 %v373, %v387
        %v392 = vadd.f32 %v374, %v388
        %v393 = vadd.f32 %v375, %v389
        %s394 = sld [smem:[#allocation3 + $0x3]]
        %v395 = vstv %s394
        %v396 = vmul.f32 %v395, %v308
        %v397 = vmul.f32 %v395, %v309
        %v398 = vmul.f32 %v395, %v310
        %v399 = vmul.f32 %v395, %v311
        %v400 = vmul.f32 %v395, %v334
        %v401 = vmul.f32 %v395, %v335
        %v402 = vmul.f32 %v395, %v336
        %v403 = vmul.f32 %v395, %v337
        %s404 = sld [smem:[#allocation3 + $0x4]]
        %v405 = vstv %s404
        %v406 = vmul.f32 %v405, %v319
        %v407 = vmul.f32 %v405, %v320
        %v408 = vmul.f32 %v405, %v321
        %v409 = vmul.f32 %v405, %v322
        %v410 = vadd.f32 %v396, %v406
        %v411 = vadd.f32 %v397, %v407
        %v412 = vadd.f32 %v398, %v408
        %v413 = vadd.f32 %v399, %v409
        %v414 = vmul.f32 %v405, %v339
        %v415 = vmul.f32 %v405, %v340
        %v416 = vmul.f32 %v405, %v341
        %v417 = vmul.f32 %v405, %v342
        %v418 = vadd.f32 %v400, %v414
        %v419 = vadd.f32 %v401, %v415
        %v420 = vadd.f32 %v402, %v416
        %v421 = vadd.f32 %v403, %v417
        %s422 = sld [smem:[#allocation3 + $0x5]]
        %v423 = vstv %s422
        %v424 = vmul.f32 %v423, %v330
        %v425 = vmul.f32 %v423, %v331
        %v426 = vmul.f32 %v423, %v332
        %v427 = vmul.f32 %v423, %v333
        %v428 = vadd.f32 %v410, %v424
        %v429 = vadd.f32 %v411, %v425
        %v430 = vadd.f32 %v412, %v426
        %v431 = vadd.f32 %v413, %v427
        %v432 = vmul.f32 %v423, %v344
        %v433 = vmul.f32 %v423, %v345
        %v434 = vmul.f32 %v423, %v346
        %v435 = vmul.f32 %v423, %v347
        %v436 = vadd.f32 %v418, %v432
        %v437 = vadd.f32 %v419, %v433
        %v438 = vadd.f32 %v420, %v434
        %v439 = vadd.f32 %v421, %v435
        %s440 = sld [smem:[#allocation3 + $0x6]]
        %v441 = vstv %s440
        %v442 = vmul.f32 %v441, %v308
        %v443 = vmul.f32 %v441, %v309
        %v444 = vmul.f32 %v441, %v310
        %v445 = vmul.f32 %v441, %v311
        %v446 = vmul.f32 %v441, %v334
        %v447 = vmul.f32 %v441, %v335
        %v448 = vmul.f32 %v441, %v336
        %v449 = vmul.f32 %v441, %v337
        %s450 = sld [smem:[#allocation3 + $0x7]]
        %v451 = vstv %s450
        %v452 = vmul.f32 %v451, %v319
        %v453 = vmul.f32 %v451, %v320
        %v454 = vmul.f32 %v451, %v321
        %v455 = vmul.f32 %v451, %v322
        %v456 = vadd.f32 %v442, %v452
        %v457 = vadd.f32 %v443, %v453
        %v458 = vadd.f32 %v444, %v454
        %v459 = vadd.f32 %v445, %v455
        %v460 = vmul.f32 %v451, %v339
        %v461 = vmul.f32 %v451, %v340
        %v462 = vmul.f32 %v451, %v341
        %v463 = vmul.f32 %v451, %v342
        %v464 = vadd.f32 %v446, %v460
        %v465 = vadd.f32 %v447, %v461
        %v466 = vadd.f32 %v448, %v462
        %v467 = vadd.f32 %v449, %v463
        %s468 = sld [smem:[#allocation3 + $0x8]]
        %v469 = vstv %s468
        %v470 = vmul.f32 %v469, %v330
        %v471 = vmul.f32 %v469, %v331
        %v472 = vmul.f32 %v469, %v332
        %v473 = vmul.f32 %v469, %v333
        %v474 = vadd.f32 %v456, %v470
        %v475 = vadd.f32 %v457, %v471
        %v476 = vadd.f32 %v458, %v472
        %v477 = vadd.f32 %v459, %v473
        %v478 = vmul.f32 %v469, %v344
        %v479 = vmul.f32 %v469, %v345
        %v480 = vmul.f32 %v469, %v346
        %v481 = vmul.f32 %v469, %v347
        %v482 = vadd.f32 %v464, %v478
        %v483 = vadd.f32 %v465, %v479
        %v484 = vadd.f32 %v466, %v480
        %v485 = vadd.f32 %v467, %v481
        %v486 = vstv %s300
        %v487 = vsub.f32 %v382, %v486
        %v488 = vsub.f32 %v383, %v486
        %v489 = vsub.f32 %v384, %v486
        %v490 = vsub.f32 %v385, %v486
        %v491 = vmul.f32 %v390, %v390
        %v492 = vmul.f32 %v391, %v391
        %v493 = vmul.f32 %v392, %v392
        %v494 = vmul.f32 %v393, %v393
        %v495 = vadd.f32 %v491, 0.0
        %v496 = vadd.f32 %v492, 0.0
        %v497 = vadd.f32 %v493, 0.0
        %v498 = vadd.f32 %v494, 0.0
        %v499 = vmul.f32 %v436, %v436
        %v500 = vmul.f32 %v437, %v437
        %v501 = vmul.f32 %v438, %v438
        %v502 = vmul.f32 %v439, %v439
        %v503 = vadd.f32 %v495, %v499
        %v504 = vadd.f32 %v496, %v500
        %v505 = vadd.f32 %v497, %v501
        %v506 = vadd.f32 %v498, %v502
        %v507 = vmul.f32 %v482, %v482
        %v508 = vmul.f32 %v483, %v483
        %v509 = vmul.f32 %v484, %v484
        %v510 = vmul.f32 %v485, %v485
        %v511 = vadd.f32 %v503, %v507
        %v512 = vadd.f32 %v504, %v508
        %v513 = vadd.f32 %v505, %v509
        %v514 = vadd.f32 %v506, %v510
        %v515 = vmul.f32 %v390, %v487
        %v516 = vmul.f32 %v391, %v488
        %v517 = vmul.f32 %v392, %v489
        %v518 = vmul.f32 %v393, %v490
        %v519 = vadd.f32 %v515, 0.0
        %v520 = vadd.f32 %v516, 0.0
        %v521 = vadd.f32 %v517, 0.0
        %v522 = vadd.f32 %v518, 0.0
        %v523 = vmul.f32 %v436, %v428
        %v524 = vmul.f32 %v437, %v429
        %v525 = vmul.f32 %v438, %v430
        %v526 = vmul.f32 %v439, %v431
        %v527 = vadd.f32 %v519, %v523
        %v528 = vadd.f32 %v520, %v524
        %v529 = vadd.f32 %v521, %v525
        %v530 = vadd.f32 %v522, %v526
        %v531 = vmul.f32 %v482, %v474
        %v532 = vmul.f32 %v483, %v475
        %v533 = vmul.f32 %v484, %v476
        %v534 = vmul.f32 %v485, %v477
        %v535 = vadd.f32 %v527, %v531
        %v536 = vadd.f32 %v528, %v532
        %v537 = vadd.f32 %v529, %v533
        %v538 = vadd.f32 %v530, %v534
        %v539 = vmul.f32 %v487, %v487
        %v540 = vmul.f32 %v488, %v488
        %v541 = vmul.f32 %v489, %v489
        %v542 = vmul.f32 %v490, %v490
        %v543 = vadd.f32 %v539, 0.0
        %v544 = vadd.f32 %v540, 0.0
        %v545 = vadd.f32 %v541, 0.0
        %v546 = vadd.f32 %v542, 0.0
        %v547 = vmul.f32 %v428, %v428
        %v548 = vmul.f32 %v429, %v429
        %v549 = vmul.f32 %v430, %v430
        %v550 = vmul.f32 %v431, %v431
        %v551 = vadd.f32 %v543, %v547
        %v552 = vadd.f32 %v544, %v548
        %v553 = vadd.f32 %v545, %v549
        %v554 = vadd.f32 %v546, %v550
        %v555 = vmul.f32 %v474, %v474
        %v556 = vmul.f32 %v475, %v475
        %v557 = vmul.f32 %v476, %v476
        %v558 = vmul.f32 %v477, %v477
        %v559 = vadd.f32 %v551, %v555
        %v560 = vadd.f32 %v552, %v556
        %v561 = vadd.f32 %v553, %v557
        %v562 = vadd.f32 %v554, %v558
        %s563 = smul.f32 %s300, %s300
        %v564 = vstv %s563
        %v565 = vsub.f32 %v559, %v564
        %v566 = vsub.f32 %v560, %v564
        %v567 = vsub.f32 %v561, %v564
        %v568 = vsub.f32 %v562, %v564
        %v569 = vmul.f32 %v535, %v535
        %v570 = vmul.f32 %v536, %v536
        %v571 = vmul.f32 %v537, %v537
        %v572 = vmul.f32 %v538, %v538
        %v573 = vmul.f32 %v511, %v565
        %v574 = vmul.f32 %v512, %v566
        %v575 = vmul.f32 %v513, %v567
        %v576 = vmul.f32 %v514, %v568
        %v577 = vsub.f32 %v569, %v573
        %v578 = vsub.f32 %v570, %v574
        %v579 = vsub.f32 %v571, %v575
        %v580 = vsub.f32 %v572, %v576
        %v581 = vmax.f32 %v577, 0.0
        %v582 = vmax.f32 %v578, 0.0
        %v583 = vmax.f32 %v579, 0.0
        %v584 = vmax.f32 %v580, 0.0
        %v585 = vrsqrt.pop %v581
        %v586 = vmul.f32 %v581, %v585
        %vm587 = vcmp.eq.f32.partialorder %v581, inf
        %v588 = vsel %vm587, %v581, %v586
        %vm589 = vcmp.eq.f32.partialorder %v581, 0.0
        %v590 = vand.u32 %v581, 2147483648
        %v591 = vsel %vm589, %v590, %v588
        %v592 = vrsqrt.pop %v582
        %v593 = vmul.f32 %v582, %v592
        %vm594 = vcmp.eq.f32.partialorder %v582, inf
        %v595 = vsel %vm594, %v582, %v593
        %vm596 = vcmp.eq.f32.partialorder %v582, 0.0
        %v597 = vand.u32 %v582, 2147483648
        %v598 = vsel %vm596, %v597, %v595
        %v599 = vrsqrt.pop %v583
        %v600 = vmul.f32 %v583, %v599
        %vm601 = vcmp.eq.f32.partialorder %v583, inf
        %v602 = vsel %vm601, %v583, %v600
        %vm603 = vcmp.eq.f32.partialorder %v583, 0.0
        %v604 = vand.u32 %v583, 2147483648
        %v605 = vsel %vm603, %v604, %v602
        %v606 = vrsqrt.pop %v584
        %v607 = vmul.f32 %v584, %v606
        %vm608 = vcmp.eq.f32.partialorder %v584, inf
        %v609 = vsel %vm608, %v584, %v607
        %vm610 = vcmp.eq.f32.partialorder %v584, 0.0
        %v611 = vand.u32 %v584, 2147483648
        %v612 = vsel %vm610, %v611, %v609
        %v613 = vrcp.pop %v511
        %v614 = vrcp.pop %v512
        %v615 = vrcp.pop %v513
        %v616 = vrcp.pop %v514
        %v617 = vsub.f32 0.0, %v535
        %v618 = vsub.f32 0.0, %v536
        %v619 = vsub.f32 0.0, %v537
        %v620 = vsub.f32 0.0, %v538
        %v621 = vsub.f32 %v617, %v591
        %v622 = vsub.f32 %v618, %v598
        %v623 = vsub.f32 %v619, %v605
        %v624 = vsub.f32 %v620, %v612
        %v625 = vmul.f32 %v621, %v613
        %v626 = vmul.f32 %v622, %v614
        %v627 = vmul.f32 %v623, %v615
        %v628 = vmul.f32 %v624, %v616
        %v629 = vadd.f32 %v617, %v591
        %v630 = vadd.f32 %v618, %v598
        %v631 = vadd.f32 %v619, %v605
        %v632 = vadd.f32 %v620, %v612
        %v633 = vmul.f32 %v629, %v613
        %v634 = vmul.f32 %v630, %v614
        %v635 = vmul.f32 %v631, %v615
        %v636 = vmul.f32 %v632, %v616
        %v637 = vmul.f32 %v625, %v390
        %v638 = vmul.f32 %v626, %v391
        %v639 = vmul.f32 %v627, %v392
        %v640 = vmul.f32 %v628, %v393
        %v641 = vadd.f32 %v382, %v637
        %v642 = vadd.f32 %v383, %v638
        %v643 = vadd.f32 %v384, %v639
        %v644 = vadd.f32 %v385, %v640
        %v645 = vmul.f32 %v633, %v390
        %v646 = vmul.f32 %v634, %v391
        %v647 = vmul.f32 %v635, %v392
        %v648 = vmul.f32 %v636, %v393
        %v649 = vadd.f32 %v382, %v645
        %v650 = vadd.f32 %v383, %v646
        %v651 = vadd.f32 %v384, %v647
        %v652 = vadd.f32 %v385, %v648
        %v653 = vand.u32 2147483647, %v641
        %v654 = vand.u32 2147483647, %v642
        %v655 = vand.u32 2147483647, %v643
        %v656 = vand.u32 2147483647, %v644
        %v657 = vand.u32 2147483647, %v649
        %v658 = vand.u32 2147483647, %v650
        %v659 = vand.u32 2147483647, %v651
        %v660 = vand.u32 2147483647, %v652
        %vm661 = vcmp.le.f32.partialorder %v653, %v657
        %vm662 = vcmp.le.f32.partialorder %v654, %v658
        %vm663 = vcmp.le.f32.partialorder %v655, %v659
        %vm664 = vcmp.le.f32.partialorder %v656, %v660
        %v665 = vsel %vm661, %v625, %v633
        %v666 = vsel %vm662, %v626, %v634
        %v667 = vsel %vm663, %v627, %v635
        %v668 = vsel %vm664, %v628, %v636
        %v669 = vmul.f32 %v665, %v390
        %v670 = vmul.f32 %v666, %v391
        %v671 = vmul.f32 %v667, %v392
        %v672 = vmul.f32 %v668, %v393
        %v673 = vadd.f32 %v382, %v669
        %v674 = vadd.f32 %v383, %v670
        %v675 = vadd.f32 %v384, %v671
        %v676 = vadd.f32 %v385, %v672
        %v677 = vmul.f32 %v665, %v436
        %v678 = vmul.f32 %v666, %v437
        %v679 = vmul.f32 %v667, %v438
        %v680 = vmul.f32 %v668, %v439
        %v681 = vadd.f32 %v428, %v677
        %v682 = vadd.f32 %v429, %v678
        %v683 = vadd.f32 %v430, %v679
        %v684 = vadd.f32 %v431, %v680
        %v685 = vmul.f32 %v665, %v482
        %v686 = vmul.f32 %v666, %v483
        %v687 = vmul.f32 %v667, %v484
        %v688 = vmul.f32 %v668, %v485
        %v689 = vadd.f32 %v474, %v685
        %v690 = vadd.f32 %v475, %v686
        %v691 = vadd.f32 %v476, %v687
        %v692 = vadd.f32 %v477, %v688
        %v693 = vmul.f32 %v681, %v681
        %v694 = vmul.f32 %v682, %v682
        %v695 = vmul.f32 %v683, %v683
        %v696 = vmul.f32 %v684, %v684
        %v697 = vadd.f32 %v693, 0.0
        %v698 = vadd.f32 %v694, 0.0
        %v699 = vadd.f32 %v695, 0.0
        %v700 = vadd.f32 %v696, 0.0
        %v701 = vmul.f32 %v689, %v689
        %v702 = vmul.f32 %v690, %v690
        %v703 = vmul.f32 %v691, %v691
        %v704 = vmul.f32 %v692, %v692
        %v705 = vadd.f32 %v697, %v701
        %v706 = vadd.f32 %v698, %v702
        %v707 = vadd.f32 %v699, %v703
        %v708 = vadd.f32 %v700, %v704
        %vm709 = vcmp.ge.f32.partialorder %v577, 0.0
        %vm710 = vcmp.ge.f32.partialorder %v578, 0.0
        %vm711 = vcmp.ge.f32.partialorder %v579, 0.0
        %vm712 = vcmp.ge.f32.partialorder %v580, 0.0
        %s713 = smul.f32 %s301, %s301
        %v714 = vstv %s713
        %vm715 = vcmp.le.f32.partialorder %v705, %v714
        %vm716 = vcmp.le.f32.partialorder %v706, %v714
        %vm717 = vcmp.le.f32.partialorder %v707, %v714
        %vm718 = vcmp.le.f32.partialorder %v708, %v714
        %vm719 = vmand %vm709, %vm715
        %vm720 = vmand %vm710, %vm716
        %vm721 = vmand %vm711, %vm717
        %vm722 = vmand %vm712, %vm718
        %v723 = vsub.f32 %v673, %v486
        %v724 = vsub.f32 %v674, %v486
        %v725 = vsub.f32 %v675, %v486
        %v726 = vsub.f32 %v676, %v486
        %s727 = sld [smem:[#allocation3 + $0x9]]
        %v728 = vstv %s727
        %v729 = vmul.f32 %v728, %v723
        %v730 = vmul.f32 %v728, %v724
        %v731 = vmul.f32 %v728, %v725
        %v732 = vmul.f32 %v728, %v726
        %s733 = sld [smem:[#allocation3 + $0xa]]
        %v734 = vstv %s733
        %v735 = vmul.f32 %v734, %v681
        %v736 = vmul.f32 %v734, %v682
        %v737 = vmul.f32 %v734, %v683
        %v738 = vmul.f32 %v734, %v684
        %v739 = vadd.f32 %v729, %v735
        %v740 = vadd.f32 %v730, %v736
        %v741 = vadd.f32 %v731, %v737
        %v742 = vadd.f32 %v732, %v738
        %s743 = sld [smem:[#allocation3 + $0xb]]
        %v744 = vstv %s743
        %v745 = vmul.f32 %v744, %v689
        %v746 = vmul.f32 %v744, %v690
        %v747 = vmul.f32 %v744, %v691
        %v748 = vmul.f32 %v744, %v692
        %v749 = vadd.f32 %v739, %v745
        %v750 = vadd.f32 %v740, %v746
        %v751 = vadd.f32 %v741, %v747
        %v752 = vadd.f32 %v742, %v748
        %s753 = sld [smem:[#allocation3 + $0xc]]
        %v754 = vstv %s753
        %v755 = vmul.f32 %v754, %v723
        %v756 = vmul.f32 %v754, %v724
        %v757 = vmul.f32 %v754, %v725
        %v758 = vmul.f32 %v754, %v726
        %s759 = sld [smem:[#allocation3 + $0xd]]
        %v760 = vstv %s759
        %v761 = vmul.f32 %v760, %v681
        %v762 = vmul.f32 %v760, %v682
        %v763 = vmul.f32 %v760, %v683
        %v764 = vmul.f32 %v760, %v684
        %v765 = vadd.f32 %v755, %v761
        %v766 = vadd.f32 %v756, %v762
        %v767 = vadd.f32 %v757, %v763
        %v768 = vadd.f32 %v758, %v764
        %s769 = sld [smem:[#allocation3 + $0xe]]
        %v770 = vstv %s769
        %v771 = vmul.f32 %v770, %v689
        %v772 = vmul.f32 %v770, %v690
        %v773 = vmul.f32 %v770, %v691
        %v774 = vmul.f32 %v770, %v692
        %v775 = vadd.f32 %v765, %v771
        %v776 = vadd.f32 %v766, %v772
        %v777 = vadd.f32 %v767, %v773
        %v778 = vadd.f32 %v768, %v774
        %s779 = sld [smem:[#allocation3 + $0xf]]
        %v780 = vstv %s779
        %v781 = vmul.f32 %v780, %v723
        %v782 = vmul.f32 %v780, %v724
        %v783 = vmul.f32 %v780, %v725
        %v784 = vmul.f32 %v780, %v726
        %s785 = sld [smem:[#allocation3 + $0x10]]
        %v786 = vstv %s785
        %v787 = vmul.f32 %v786, %v681
        %v788 = vmul.f32 %v786, %v682
        %v789 = vmul.f32 %v786, %v683
        %v790 = vmul.f32 %v786, %v684
        %v791 = vadd.f32 %v781, %v787
        %v792 = vadd.f32 %v782, %v788
        %v793 = vadd.f32 %v783, %v789
        %v794 = vadd.f32 %v784, %v790
        %s795 = sld [smem:[#allocation3 + $0x11]]
        %v796 = vstv %s795
        %v797 = vmul.f32 %v796, %v689
        %v798 = vmul.f32 %v796, %v690
        %v799 = vmul.f32 %v796, %v691
        %v800 = vmul.f32 %v796, %v692
        %v801 = vadd.f32 %v791, %v797
        %v802 = vadd.f32 %v792, %v798
        %v803 = vadd.f32 %v793, %v799
        %v804 = vadd.f32 %v794, %v800
        %v805 = vmul.f32 %v749, %v749
        %v806 = vmul.f32 %v750, %v750
        %v807 = vmul.f32 %v751, %v751
        %v808 = vmul.f32 %v752, %v752
        %v809 = vadd.f32 %v805, 0.0
        %v810 = vadd.f32 %v806, 0.0
        %v811 = vadd.f32 %v807, 0.0
        %v812 = vadd.f32 %v808, 0.0
        %v813 = vmul.f32 %v775, %v775
        %v814 = vmul.f32 %v776, %v776
        %v815 = vmul.f32 %v777, %v777
        %v816 = vmul.f32 %v778, %v778
        %v817 = vadd.f32 %v809, %v813
        %v818 = vadd.f32 %v810, %v814
        %v819 = vadd.f32 %v811, %v815
        %v820 = vadd.f32 %v812, %v816
        %v821 = vmul.f32 %v801, %v801
        %v822 = vmul.f32 %v802, %v802
        %v823 = vmul.f32 %v803, %v803
        %v824 = vmul.f32 %v804, %v804
        %v825 = vadd.f32 %v817, %v821
        %v826 = vadd.f32 %v818, %v822
        %v827 = vadd.f32 %v819, %v823
        %v828 = vadd.f32 %v820, %v824
        %v829 = vrsqrt.pop %v825
        %v830 = vrsqrt.pop %v826
        %v831 = vrsqrt.pop %v827
        %v832 = vrsqrt.pop %v828
        %833 = vst [vmem:[%s287] sm:$0xff] %v665
        %834 = vst [vmem:[%s287 + $0x8] sm:$0xff] %v666
        %835 = vst [vmem:[%s287 + $0x10] sm:$0xff] %v667
        %836 = vst [vmem:[%s287 + $0x18] sm:$0xff] %v668
        %v837 = vmul.f32 %v749, %v829
        %v838 = vmul.f32 %v750, %v830
        %v839 = vmul.f32 %v751, %v831
        %v840 = vmul.f32 %v752, %v832
        %s841 = scalar_lea.vmem %s287, 32 [#allocation9]
        %842 = vst [vmem:[%s841] sm:$0xff] %v837
        %843 = vst [vmem:[%s841 + $0x8] sm:$0xff] %v838
        %844 = vst [vmem:[%s841 + $0x10] sm:$0xff] %v839
        %845 = vst [vmem:[%s841 + $0x18] sm:$0xff] %v840
        %v846 = vmul.f32 %v775, %v829
        %v847 = vmul.f32 %v776, %v830
        %v848 = vmul.f32 %v777, %v831
        %v849 = vmul.f32 %v778, %v832
        %s850 = scalar_lea.vmem %s287, 64 [#allocation9]
        %851 = vst [vmem:[%s850] sm:$0xff] %v846
        %852 = vst [vmem:[%s850 + $0x8] sm:$0xff] %v847
        %853 = vst [vmem:[%s850 + $0x10] sm:$0xff] %v848
        %854 = vst [vmem:[%s850 + $0x18] sm:$0xff] %v849
        %v855 = vmul.f32 %v801, %v829
        %v856 = vmul.f32 %v802, %v830
        %v857 = vmul.f32 %v803, %v831
        %v858 = vmul.f32 %v804, %v832
        %s859 = scalar_lea.vmem %s287, 96 [#allocation9]
        %860 = vst [vmem:[%s859] sm:$0xff] %v855
        %861 = vst [vmem:[%s859 + $0x8] sm:$0xff] %v856
        %862 = vst [vmem:[%s859 + $0x10] sm:$0xff] %v857
        %863 = vst [vmem:[%s859 + $0x18] sm:$0xff] %v858
        %vm864 = vmpackc.low %vm720, %vm719
        %vm865 = vmpackc.low %vm722, %vm721
        %vm866 = vmpackc.even %vm865, %vm864
        %v867 = vsel %vm866, 16843009, 0
        %868 = vst [vmem:[%s294] sm:$0xff] %v867
        %s869 = sand.u32 %s92, 1
        %s870 = scalar_lea.sflag [#allocation6], %s869
        %s871 = sand.u32 %s92, 1
        %s872 = smul.addr %s871, 128
        %s873 = scalar_lea.vmem [#allocation9], %s872
        %s874 = sand.u32 %s118, 1
        %s875 = scalar_lea.sflag [#allocation11], %s874
        %s876 = sand.u32 %s118, 1
        %s877 = smul.addr %s876, 8
        %s878 = scalar_lea.vmem [#allocation10], %s877
        // Predicated region
        $region37: #{tpu_custom_call.1} parent=27 // pred_check
          %p879 = pneg %p102
        $region38: #{tpu_custom_call.1} parent=27 // pred_check_branch
          %881 = sbr.rel (%p879) target = $region40
        $region39: #{tpu_custom_call.1} parent=27 // pred_region
          #allocation17 [shape = 'u32[6]{0}', space=smem, size = 0x18, scoped, tag = 'DMA stride descriptor']
          %s882 = smul.u32 4, %s32
          %s884 = ssub.s32 2048, 2048
          %885 = vsyncadd %s870, %s884
          %s886 = smul.addr %s882, 128
          %s887 = scalar_lea.hbm %s3, %s886
          %s889 = sshll.u32 1, 14
          %s890 = sxor.u32 4294967295, %s889
          %s893 = sshll.u32 7, 18
          %s894 = sxor.u32 4294967295, %s893
          %s895 = sand.u32 0, %s894
          %s897 = sor.u32 %s895, 0
          %s899 = sshll.u32 3, 24
          %s900 = sxor.u32 4294967295, %s899
          %s901 = sand.u32 %s897, %s900
          %s903 = sor.u32 %s901, 0
          %s904 = sshll.u32 %s873, 4
          %s905 = int_to_ptr.vmem [resolvable:$true] %s904
          %911 = sst [smem:[#allocation17]] 512
          %s912 = scalar_lea.smem [#allocation17], 1
          %913 = sst [smem:[%s912]] 1024
          %s914 = scalar_lea.smem [#allocation17], 2
          %915 = sst [smem:[%s914]] 4
          %s916 = scalar_lea.smem [#allocation17], 3
          %917 = sst [smem:[%s916]] 128
          %s918 = scalar_lea.smem [#allocation17], 4
          %919 = sst [smem:[%s918]] 128
          %s920 = scalar_lea.smem [#allocation17], 5
          %921 = sst [smem:[%s920]] 8
          %923 = dma.general %s905, 2048, %s887, %s870, [#allocation16], [#allocation17], %s903, 0
        $region40: #{tpu_custom_call.1} parent=27 // pred_fallthru
          _
        // Predicated region
        $region41: #{tpu_custom_call.1} parent=27 // pred_check
          %p924 = pneg %p128
        $region42: #{tpu_custom_call.1} parent=27 // pred_check_branch
          %926 = sbr.rel (%p924) target = $region44
        $region43: #{tpu_custom_call.1} parent=27 // pred_region
          %s928 = ssub.s32 128, 128
          %929 = vsyncadd %s875, %s928
          %s930 = smul.addr %s32, 128
          %s931 = scalar_lea.hbm %s4, %s930
          %s933 = sshll.u32 %s878, 4
          %s934 = int_to_ptr.vmem [resolvable:$true] %s933
          %936 = dma.vmem_to_hbm [thread:$0]  %s934, 128, %s931, %s875
        $region44: #{tpu_custom_call.1} parent=27 // pred_fallthru
          _
      $region28: #{tpu_custom_call.1} parent=5 // pred_fallthru
        _
      %p937 = scmp.le.s32.totalorder 2, %s27
      // Predicated region
      $region45: #{tpu_custom_call.1} parent=5 // pred_check
        %p938 = pneg %p937
      $region46: #{tpu_custom_call.1} parent=5 // pred_check_branch
        %940 = sbr.rel (%p938) target = $region48
      $region47: #{tpu_custom_call.1} parent=5 // pred_region
        %s941 = ssub.s32 %s27, 2
        // Predicated region
        $region49: #{tpu_custom_call.1} parent=47 // pred_check
          %p942 = pneg %p108
        $region50: #{tpu_custom_call.1} parent=47 // pred_check_branch
          %944 = sbr.rel (%p942) target = $region52
        $region51: #{tpu_custom_call.1} parent=47 // pred_region
          %s945 = sand.u32 %s93, 1
          %s946 = scalar_lea.sflag [#allocation6], %s945
          %s947 = sand.u32 %s93, 1
          %s948 = smul.addr %s947, 128
          %s949 = scalar_lea.vmem [#allocation9], %s948
          %950 = dma.done %s946, 2048
        $region52: #{tpu_custom_call.1} parent=47 // pred_fallthru
          _
        // Predicated region
        $region53: #{tpu_custom_call.1} parent=47 // pred_check
          %p951 = pneg %p134
        $region54: #{tpu_custom_call.1} parent=47 // pred_check_branch
          %953 = sbr.rel (%p951) target = $region56
        $region55: #{tpu_custom_call.1} parent=47 // pred_region
          %s954 = sand.u32 %s119, 1
          %s955 = scalar_lea.sflag [#allocation11], %s954
          %s956 = sand.u32 %s119, 1
          %s957 = smul.addr %s956, 8
          %s958 = scalar_lea.vmem [#allocation10], %s957
          %959 = dma.done %s955, 128
        $region56: #{tpu_custom_call.1} parent=47 // pred_fallthru
          _
      $region48: #{tpu_custom_call.1} parent=5 // pred_fallthru
        _
    $region6: #{tpu_custom_call.1} parent=1 // loop_footer
      %s31 = sadd.s32 1, %s27
    $region7: #{tpu_custom_call.1} parent=1 // loop_footer_branch
      %26 = sbr.rel target = $region3
    $region8: #{tpu_custom_call.1} parent=1 // loop_exit
      _
    %960 = vsyncpa [#allocation5], 1
    %s961 = scalar_lea.sflag [#allocation5], 1
    %962 = vsyncpa %s961, 1
    %963 = vsyncpa [#allocation8], 1
    %s964 = scalar_lea.sflag [#allocation8], 1
    %965 = vsyncpa %s964, 1
    %966 = vsyncpa [#allocation6], 1
    %s967 = scalar_lea.sflag [#allocation6], 1
    %968 = vsyncpa %s967, 1
    %969 = vsyncpa [#allocation11], 1
    %s970 = scalar_lea.sflag [#allocation11], 1
    %971 = vsyncpa %s970, 1

</llo_original>
